<compile_context>
chip_gen: v6e
topology: v6e:2x2x1
jax: 0.10.0
libtpu: 0.0.40
codegen_flags: <defaults>
</compile_context>

<pallas_src>
import functools

import jax
import jax.numpy as jnp
from jax.experimental import pallas as pl
from jax.experimental.pallas import tpu as pltpu

LANE = 128


def _round_up(n, m):
    return -(-n // m) * m


def _pick_batch_tile(batch, tb_max=1024):
    """Largest sublane-aligned batch tile <= tb_max keeping >= 2 grid steps.

    v7x has 2 TensorCores; dimension_semantics=('parallel',) only helps if the
    grid has at least 2 steps.  Larger tiles amortize the ~0.35 us per-step
    overhead, so take the biggest tile that still splits the batch in two.
    """
    bp = _round_up(max(batch, 8), 8)
    if bp <= 16:
        return bp                                  # too small to split
    half = _round_up(pl.cdiv(bp, 2), 8)            # grid >= 2
    return min(tb_max, half)


def majority_vote_kernel(x_ref, w_ref, thr_ref, o_ref, *, majority):
    # x_ref:   (TB, K) f32   batch tile of x (global-avg-pool folded into W)
    # w_ref:   (K, M)  f32   fused per-model classifier-head weights
    # thr_ref: (1, M)  f32   logit-space thresholds (sigmoid + bias folded in)
    # o_ref:   (TB, 1) int32 majority decision (0/1)
    logits = jnp.dot(x_ref[...], w_ref[...],
                     preferred_element_type=jnp.float32)          # MXU, (TB, M)
    votes = (logits >= thr_ref[...]).astype(jnp.int32)            # VPU compare
    count = jnp.sum(votes, axis=1, keepdims=True)                 # XLU reduce
    o_ref[...] = (count > majority).astype(jnp.int32)


def majority_voting_ensemble(x_nchw, w_stacked, b_stacked, thresholds, *,
                             tb_max=1024):
    """x_nchw: (B, C, H, W); w_stacked: (C, M); b_stacked: (M,); thresholds: (M,).

    Returns (B, 1) bool, matching the torch module's output.
    """
    B, C, H, W = x_nchw.shape
    M = w_stacked.shape[1]
    HW = H * W
    K = C * HW

    # ---- parameter preprocessing (tiny, wrapper side) -----------------------
    # Fold the global average pool into the matmul weights (kept f32: K is
    # small, and bf16 rounding of w/HW would add a systematic bias).
    w_fused = jnp.repeat(w_stacked.astype(jnp.float32) / HW, HW, axis=0)   # (K, M)

    # sigmoid(z + b) >= thr  <=>  z >= logit(thr) - b  (sigmoid is monotonic).
    # thr <= 0  -> always vote;  thr >= 1 -> never vote.
    # TODO(synk): torch f32 sigmoid saturates to exactly 1.0 for z ~> 17, so
    # thr == 1.0 could technically still vote there; edge-case-only mismatch.
    thr = thresholds.astype(jnp.float32)
    t_eff = jnp.where(thr <= 0.0, -jnp.inf,
                      jnp.where(thr >= 1.0, jnp.inf,
                                jnp.log(thr) - jnp.log1p(-thr)))
    t_eff = (t_eff - b_stacked.astype(jnp.float32)).reshape(1, M)

    # ---- input layout (no HBM round-trip: reshape is a view, no cast/pad) ---
    x_flat = x_nchw.reshape(B, K)

    tb = _pick_batch_tile(B, tb_max)
    grid = (pl.cdiv(B, tb),)

    # Double-buffered x tile + weight/thr/out buffers + intermediates + slack.
    itemsize = jnp.dtype(x_flat.dtype).itemsize
    vmem_est = (2 * tb * K * itemsize          # x tile, double-buffered
                + 2 * K * LANE * 4             # (K, M) weights (lane-padded in VMEM)
                + 4 * tb * LANE * 4            # output blocks + (TB, M) intermediates
                + (2 << 20))                   # slack
    vmem_limit = int(min(max(vmem_est, 16 << 20), 64 << 20))

    out = pl.pallas_call(
        functools.partial(majority_vote_kernel, majority=M // 2),
        out_shape=jax.ShapeDtypeStruct((B, 1), jnp.int32),
        grid=grid,
        in_specs=[
            pl.BlockSpec((tb, K), lambda i: (i, 0)),   # batch tile of x
            pl.BlockSpec((K, M), lambda i: (0, 0)),    # fused head weights (grid-invariant)
            pl.BlockSpec((1, M), lambda i: (0, 0)),    # logit-space thresholds
        ],
        out_specs=pl.BlockSpec((tb, 1), lambda i: (i, 0)),
        compiler_params=pltpu.CompilerParams(
            dimension_semantics=("parallel",),         # v7x: shard batch over 2 TCs
            vmem_limit_bytes=vmem_limit),
    )(x_flat, w_fused, t_eff)

    return out.astype(jnp.bool_)


def reference_ensemble_f32(x_nchw, w_stacked, b_stacked, thresholds):
    """Pure-JAX f32 reference mirroring the torch forward exactly."""
    B, C, H, W = x_nchw.shape
    pooled = jnp.mean(x_nchw.reshape(B, C, H * W), axis=-1)
    logits = pooled @ w_stacked + b_stacked[None, :]
    votes = jax.nn.sigmoid(logits) >= thresholds[None, :]
    M = votes.shape[1]
    return jnp.sum(votes.astype(jnp.int32), axis=1, keepdims=True) > (M // 2)


if __name__ == "__main__":
    key = jax.random.PRNGKey(0)
    k_x, k_w, k_b = jax.random.split(key, 3)

    # NaiveNet-style 3-channel images; batch small but big enough that the
    # adaptive tile picker yields a 2-step grid (tb=32 -> grid=(2,)).
    B, C, H, W = 64, 3, 16, 16
    M = 5                                   # number of ensemble members (odd)

    x = jax.random.normal(k_x, (B, C, H, W), dtype=jnp.float32)
    w_stacked = jax.random.normal(k_w, (C, M), dtype=jnp.float32)       # Linear(C,1) per model
    b_stacked = 0.1 * jax.random.normal(k_b, (M,), dtype=jnp.float32)   # per-model biases
    thresholds = jnp.array([0.5, 0.4, 0.6, 0.55, 0.45], dtype=jnp.float32)

    out = majority_voting_ensemble(x, w_stacked, b_stacked, thresholds)
    out = jax.block_until_ready(out)
    assert out.shape == (B, 1) and out.dtype == jnp.bool_

    ref = reference_ensemble_f32(x, w_stacked, b_stacked, thresholds)
    agree = float(jnp.mean((out == ref).astype(jnp.float32)))
    # f32 end-to-end; only pool-fold reassociation differs, so agreement
    # should be exact except for votes sitting precisely on the boundary.
    assert agree >= 0.99, f"agreement with f32 reference too low: {agree}"

    print("KERNEL_OK")
</pallas_src>

<mosaic_0001>
module attributes {stable_mosaic.version = 11 : i64} {
  func.func @majority_vote_kernel(%arg0: i32, %arg1: memref<32x768xf32, #tpu.memory_space<vmem>>, %arg2: memref<768x5xf32, #tpu.memory_space<vmem>>, %arg3: memref<1x5xf32, #tpu.memory_space<vmem>>, %arg4: memref<32x1xi32, #tpu.memory_space<vmem>>) attributes {dimension_semantics = [#tpu.dimension_semantics<parallel>], iteration_bounds = array<i64: 2>, scalar_prefetch = 0 : i64, scratch_operands = 0 : i64, tpu.core_type = #tpu.core_type<tc>, window_params = [{transform_indices = @transform_0, window_bounds = array<i64: 32, 768>}, {pipeline_mode = #tpu.pipeline_mode<synchronous>, transform_indices = @transform_1, window_bounds = array<i64: 768, 5>}, {pipeline_mode = #tpu.pipeline_mode<synchronous>, transform_indices = @transform_2, window_bounds = array<i64: 1, 5>}, {transform_indices = @transform_3, window_bounds = array<i64: 32, 1>}]} {
    %c0 = arith.constant 0 : index
    %c0_0 = arith.constant 0 : index
    %0 = vector.load %arg1[%c0, %c0_0] : memref<32x768xf32, #tpu.memory_space<vmem>>, vector<32x768xf32>
    %c0_1 = arith.constant 0 : index
    %c0_2 = arith.constant 0 : index
    %1 = vector.load %arg2[%c0_1, %c0_2] : memref<768x5xf32, #tpu.memory_space<vmem>>, vector<768x5xf32>
    %cst = arith.constant dense<0.000000e+00> : vector<32x5xf32>
    %2 = tpu.matmul %0, %1, %cst {dimension_numbers = #tpu.dot_dimension_numbers<[1], [0], [0], [1], [0, 0, 1, 1], [], []>} : vector<32x768xf32>, vector<768x5xf32>, vector<32x5xf32> -> vector<32x5xf32>
    %c0_3 = arith.constant 0 : index
    %c0_4 = arith.constant 0 : index
    %3 = vector.load %arg3[%c0_3, %c0_4] : memref<1x5xf32, #tpu.memory_space<vmem>>, vector<1x5xf32>
    %4 = vector.broadcast %3 : vector<1x5xf32> to vector<32x5xf32>
    %5 = arith.cmpf oge, %2, %4 : vector<32x5xf32>
    %6 = arith.extui %5 : vector<32x5xi1> to vector<32x5xi32>
    %cst_5 = arith.constant dense<0> : vector<32xi32>
    %7 = vector.multi_reduction <add>, %6, %cst_5 [1] : vector<32x5xi32> to vector<32xi32>
    %8 = vector.shape_cast %7 : vector<32xi32> to vector<32x1xi32>
    %c2_i32 = arith.constant 2 : i32
    %9 = vector.broadcast %c2_i32 : i32 to vector<32x1xi32>
    %10 = arith.cmpi sgt, %8, %9 : vector<32x1xi32>
    %11 = arith.extui %10 : vector<32x1xi1> to vector<32x1xi32>
    %c0_6 = arith.constant 0 : index
    %c0_7 = arith.constant 0 : index
    %12 = vector.load %arg4[%c0_6, %c0_7] : memref<32x1xi32, #tpu.memory_space<vmem>>, vector<32x1xi32>
    tpu.vector_store %arg4[%c0_6, %c0_7], %11 {strides = array<i32>} : memref<32x1xi32, #tpu.memory_space<vmem>>, vector<32x1xi32>,
    return
  }
  func.func @transform_0(%arg0: i32) -> (i32, i32) {
    %c0_i32 = arith.constant 0 : i32
    %c0_i32_0 = arith.constant 0 : i32
    return %arg0, %c0_i32 : i32, i32
  }
  func.func @transform_1(%arg0: i32) -> (i32, i32) {
    %c0_i32 = arith.constant 0 : i32
    %c0_i32_0 = arith.constant 0 : i32
    %c0_i32_1 = arith.constant 0 : i32
    return %c0_i32, %c0_i32_0 : i32, i32
  }
  func.func @transform_2(%arg0: i32) -> (i32, i32) {
    %c0_i32 = arith.constant 0 : i32
    %c0_i32_0 = arith.constant 0 : i32
    %c0_i32_1 = arith.constant 0 : i32
    return %c0_i32, %c0_i32_0 : i32, i32
  }
  func.func @transform_3(%arg0: i32) -> (i32, i32) {
    %c0_i32 = arith.constant 0 : i32
    %c0_i32_0 = arith.constant 0 : i32
    return %arg0, %c0_i32 : i32, i32
  }
}

</mosaic_0001>

<llo_original>
// kernel: tpu_custom_call.1
$region0: #{tpu_custom_call.1}
  #allocation0 [shape = 'u32[]', space=smem, size = 0x4, offset = 0x4, fixed_abs, tag = 'smem constant byte address 0x4 - core index']
  #allocation1 [shape = 'u32[144,128]{1,0:T(1,128)}', space=vmem, size = 0x12000, scoped, tag = 'internal scratch']
  %s0 = inlined_call_operand.vmem [shape: f32[64,768], index: 0, kind: input, shape index: {}]
  %s1 = inlined_call_operand.vmem [shape: f32[768,5], index: 1, kind: input, shape index: {}]
  %s2 = inlined_call_operand.vmem [shape: f32[1,5], index: 2, kind: input, shape index: {}]
  %s3 = inlined_call_operand.vmem [shape: s32[64,1], index: 3, kind: output, shape index: {}]
  %s4 = sld [smem:[#allocation0]]
  $region45: #{tpu_custom_call.1} parent=0
    _
  %s6 = ssub.s32 1, %s4
  %s7 = scalar_select 0, %s6, %s4
  loop: start=0, step=1, limit=4
  $region2: #{tpu_custom_call.1} parent=0 // loop_pre_header
    _
  $region3: #{tpu_custom_call.1} parent=0 // loop_header
    %s9 = sphi 0, %s13
    %p10 = scmp.ge.s32.totalorder %s9, 4
    %s19 = sphi 0, %s21
    %s22 = sphi 0, %s19
    %s23 = sphi 0, %s22
    %s39 = sphi 0, %s23
    %s43 = sphi 0, %s43
    %s45 = sphi 0, %s43
    %s46 = sphi 0, %s45
    %s60 = sphi 0, %s46
    %s64 = sphi 0, %s64
    %s66 = sphi 0, %s64
    %s67 = sphi 0, %s66
    %s81 = sphi 0, %s67
    %s87 = sphi 0, %s89
    %s90 = sphi 0, %s87
    %s91 = sphi 0, %s90
    %s107 = sphi 0, %s91
  $region4: #{tpu_custom_call.1} parent=0 // loop_header_branch
    %12 = sbr.rel (%p10) target = $region8
  $region5: #{tpu_custom_call.1} parent=0 // loop_body
    %s14 = ssub.s32 %s9, 1
    %s15 = ssub.s32 %s9, 2
    %s16 = sadd.s32 %s9, 1
    %s17 = ssub.s32 %s9, %s16
    %p18 = scmp.eq.s32.totalorder %s17, 0
    %s20 = sadd.s32 %s19, 1
    %s21 = scalar_select %p18, %s19, %s20
    %p24 = pneg %p18
    %p25 = scmp.eq.s32.totalorder %s9, 1
    %p26 = por %p24, %p25
    %p27 = scmp.ne.s32.totalorder %s19, %s22
    %p28 = scmp.eq.s32.totalorder %s9, 0
    %p29 = por %p27, %p28
    %p30 = scmp.ne.s32.totalorder %s19, %s22
    %p31 = scmp.eq.s32.totalorder %s14, 1
    %p32 = por %p30, %p31
    %p33 = scmp.ne.s32.totalorder %s22, %s23
    %p34 = scmp.eq.s32.totalorder %s14, 0
    %p35 = por %p33, %p34
    %p36 = scmp.ne.s32.totalorder %s22, %s23
    %p37 = scmp.eq.s32.totalorder %s15, 1
    %p38 = por %p36, %p37
    %p40 = scmp.ne.s32.totalorder %s23, %s39
    %p41 = scmp.eq.s32.totalorder %s15, 0
    %p42 = por %p40, %p41
    %s44 = sadd.s32 %s43, 1
    %p47 = scmp.eq.s32.totalorder %s9, 1
    %p48 = scmp.ne.s32.totalorder %s43, %s45
    %p49 = scmp.eq.s32.totalorder %s9, 0
    %p50 = por %p48, %p49
    %p51 = scmp.ne.s32.totalorder %s43, %s45
    %p52 = scmp.eq.s32.totalorder %s14, 1
    %p53 = por %p51, %p52
    %p54 = scmp.ne.s32.totalorder %s45, %s46
    %p55 = scmp.eq.s32.totalorder %s14, 0
    %p56 = por %p54, %p55
    %p57 = scmp.ne.s32.totalorder %s45, %s46
    %p58 = scmp.eq.s32.totalorder %s15, 1
    %p59 = por %p57, %p58
    %p61 = scmp.ne.s32.totalorder %s46, %s60
    %p62 = scmp.eq.s32.totalorder %s15, 0
    %p63 = por %p61, %p62
    %s65 = sadd.s32 %s64, 1
    %p68 = scmp.eq.s32.totalorder %s9, 1
    %p69 = scmp.ne.s32.totalorder %s64, %s66
    %p70 = scmp.eq.s32.totalorder %s9, 0
    %p71 = por %p69, %p70
    %p72 = scmp.ne.s32.totalorder %s64, %s66
    %p73 = scmp.eq.s32.totalorder %s14, 1
    %p74 = por %p72, %p73
    %p75 = scmp.ne.s32.totalorder %s66, %s67
    %p76 = scmp.eq.s32.totalorder %s14, 0
    %p77 = por %p75, %p76
    %p78 = scmp.ne.s32.totalorder %s66, %s67
    %p79 = scmp.eq.s32.totalorder %s15, 1
    %p80 = por %p78, %p79
    %p82 = scmp.ne.s32.totalorder %s67, %s81
    %p83 = scmp.eq.s32.totalorder %s15, 0
    %p84 = por %p82, %p83
    %s85 = ssub.s32 %s9, %s16
    %p86 = scmp.eq.s32.totalorder %s85, 0
    %s88 = sadd.s32 %s87, 1
    %s89 = scalar_select %p86, %s87, %s88
    %p92 = pneg %p86
    %p93 = scmp.eq.s32.totalorder %s9, 1
    %p94 = por %p92, %p93
    %p95 = scmp.ne.s32.totalorder %s87, %s90
    %p96 = scmp.eq.s32.totalorder %s9, 0
    %p97 = por %p95, %p96
    %p98 = scmp.ne.s32.totalorder %s87, %s90
    %p99 = scmp.eq.s32.totalorder %s14, 1
    %p100 = por %p98, %p99
    %p101 = scmp.ne.s32.totalorder %s90, %s91
    %p102 = scmp.eq.s32.totalorder %s14, 0
    %p103 = por %p101, %p102
    %p104 = scmp.ne.s32.totalorder %s90, %s91
    %p105 = scmp.eq.s32.totalorder %s15, 1
    %p106 = por %p104, %p105
    %p108 = scmp.ne.s32.totalorder %s91, %s107
    %p109 = scmp.eq.s32.totalorder %s15, 0
    %p110 = por %p108, %p109
    %p111 = scmp.le.s32.totalorder 1, %s9
    %p112 = scmp.lt.s32.totalorder %s9, 3
    %p113 = pnand %p111, %p112
    %p114 = pneg %p113
    // Predicated region
    $region9: #{tpu_custom_call.1} parent=5 // pred_check
      _
    $region10: #{tpu_custom_call.1} parent=5 // pred_check_branch
      %116 = sbr.rel (%p113) target = $region12
    $region11: #{tpu_custom_call.1} parent=5 // pred_region
      %s117 = ssub.s32 %s9, 1
      // Predicated region
      $region13: #{tpu_custom_call.1} parent=11 // pred_check
        %p118 = pneg %p56
      $region14: #{tpu_custom_call.1} parent=11 // pred_check_branch
        %120 = sbr.rel (%p118) target = $region16
      $region15: #{tpu_custom_call.1} parent=11 // pred_region
        _
      $region16: #{tpu_custom_call.1} parent=11 // pred_fallthru
        _
      // Predicated region
      $region17: #{tpu_custom_call.1} parent=11 // pred_check
        %p121 = pneg %p77
      $region18: #{tpu_custom_call.1} parent=11 // pred_check_branch
        %123 = sbr.rel (%p121) target = $region20
      $region19: #{tpu_custom_call.1} parent=11 // pred_region
        _
      $region20: #{tpu_custom_call.1} parent=11 // pred_fallthru
        _
    $region12: #{tpu_custom_call.1} parent=5 // pred_fallthru
      _
    %p124 = scmp.lt.s32.totalorder %s9, 2
    // Predicated region
    $region21: #{tpu_custom_call.1} parent=5 // pred_check
      %p125 = pneg %p124
    $region22: #{tpu_custom_call.1} parent=5 // pred_check_branch
      %127 = sbr.rel (%p125) target = $region24
    $region23: #{tpu_custom_call.1} parent=5 // pred_region
      // Predicated region
      $region25: #{tpu_custom_call.1} parent=23 // pred_check
        %p128 = pneg %p29
      $region26: #{tpu_custom_call.1} parent=23 // pred_check_branch
        %130 = sbr.rel (%p128) target = $region28
      $region27: #{tpu_custom_call.1} parent=23 // pred_region
        %s131 = smul.u32 4, %s9
        %p132 = scmp.lt.s32.totalorder %s131, 7
        %s133 = scalar_select %p132, %s131, 7
        %s134 = smul.addr %s133, 6
        %s135 = smul.addr %s134, 8
        %s136 = scalar_lea.vmem %s0, %s135
        %s137 = smul.u32 4, %s9
      $region28: #{tpu_custom_call.1} parent=23 // pred_fallthru
        _
    $region24: #{tpu_custom_call.1} parent=5 // pred_fallthru
      _
    %p138 = scmp.le.s32.totalorder 1, %s9
    %p139 = scmp.lt.s32.totalorder %s9, 3
    %p140 = pnand %p138, %p139
    %p141 = pneg %p140
    // Predicated region
    $region29: #{tpu_custom_call.1} parent=5 // pred_check
      _
    $region30: #{tpu_custom_call.1} parent=5 // pred_check_branch
      %143 = sbr.rel (%p140) target = $region32
    $region31: #{tpu_custom_call.1} parent=5 // pred_region
      %s144 = ssub.s32 %s9, 1
      %s145 = smul.u32 4, %s14
      %p146 = scmp.lt.s32.totalorder %s145, 7
      %s147 = scalar_select %p146, %s145, 7
      %s148 = smul.addr %s147, 6
      %s149 = smul.addr %s148, 8
      %s150 = scalar_lea.vmem %s0, %s149
      %p151 = pneg %p35
      %p152 = pneg %p32
      %p153 = pneg %p56
      %p154 = pneg %p53
      %p155 = pneg %p77
      %p156 = pneg %p74
      %p157 = pneg %p103
      %p158 = pneg %p100
      %s159 = smul.u32 4, %s14
      %p160 = scmp.lt.s32.totalorder %s159, 7
      %s161 = scalar_select %p160, %s159, 7
      %s162 = smul.addr %s161, 8
      %s163 = scalar_lea.vmem %s3, %s162
      %s164 = smul.u32 4, %s14
      %p165 = scmp.lt.s32.totalorder %s164, 7
      %s166 = scalar_select %p165, %s164, 7
      %s167 = smul.addr %s166, 6
      %s168 = smul.addr %s167, 8
      %s169 = scalar_lea.vmem %s0, %s168
      %s170 = smul.u32 4, %s14
      %s171 = smul.u32 4, %s14
      %p172 = scmp.lt.s32.totalorder %s171, 7
      %s173 = scalar_select %p172, %s171, 7
      %s174 = smul.addr %s173, 8
      %s175 = scalar_lea.vmem %s3, %s174
      %s176 = smul.u32 4, %s14
      %v177 = vld [vmem:[%s169] sm:$0xff]
      %v178 = vld [vmem:[%s169 + $0x8] sm:$0xff]
      %v179 = vld [vmem:[%s169 + $0x10] sm:$0xff]
      %v180 = vld [vmem:[%s169 + $0x18] sm:$0xff]
      %v181 = vld [vmem:[%s169 + $0x20] sm:$0xff]
      %v182 = vld [vmem:[%s169 + $0x28] sm:$0xff]
      %v183 = vld [vmem:[%s169 + $0x30] sm:$0xff]
      %v184 = vld [vmem:[%s169 + $0x38] sm:$0xff]
      %v185 = vld [vmem:[%s169 + $0x40] sm:$0xff]
      %v186 = vld [vmem:[%s169 + $0x48] sm:$0xff]
      %v187 = vld [vmem:[%s169 + $0x50] sm:$0xff]
      %v188 = vld [vmem:[%s169 + $0x58] sm:$0xff]
      %v189 = vld [vmem:[%s169 + $0x60] sm:$0xff]
      %v190 = vld [vmem:[%s169 + $0x68] sm:$0xff]
      %v191 = vld [vmem:[%s169 + $0x70] sm:$0xff]
      %v192 = vld [vmem:[%s169 + $0x78] sm:$0xff]
      %v193 = vld [vmem:[%s169 + $0x80] sm:$0xff]
      %v194 = vld [vmem:[%s169 + $0x88] sm:$0xff]
      %v195 = vld [vmem:[%s169 + $0x90] sm:$0xff]
      %v196 = vld [vmem:[%s169 + $0x98] sm:$0xff]
      %v197 = vld [vmem:[%s169 + $0xa0] sm:$0xff]
      %v198 = vld [vmem:[%s169 + $0xa8] sm:$0xff]
      %v199 = vld [vmem:[%s169 + $0xb0] sm:$0xff]
      %v200 = vld [vmem:[%s169 + $0xb8] sm:$0xff]
      %v201 = vld [vmem:[%s1] sm:$0xff]
      %v202 = vld [vmem:[%s1 + $0x8] sm:$0xff]
      %v203 = vld [vmem:[%s1 + $0x10] sm:$0xff]
      %v204 = vld [vmem:[%s1 + $0x18] sm:$0xff]
      %v205 = vld [vmem:[%s1 + $0x20] sm:$0xff]
      %v206 = vld [vmem:[%s1 + $0x28] sm:$0xff]
      %v207 = vld [vmem:[%s1 + $0x30] sm:$0xff]
      %v208 = vld [vmem:[%s1 + $0x38] sm:$0xff]
      %v209 = vld [vmem:[%s1 + $0x40] sm:$0xff]
      %v210 = vld [vmem:[%s1 + $0x48] sm:$0xff]
      %v211 = vld [vmem:[%s1 + $0x50] sm:$0xff]
      %v212 = vld [vmem:[%s1 + $0x58] sm:$0xff]
      %v213 = vld [vmem:[%s1 + $0x60] sm:$0xff]
      %v214 = vld [vmem:[%s1 + $0x68] sm:$0xff]
      %v215 = vld [vmem:[%s1 + $0x70] sm:$0xff]
      %v216 = vld [vmem:[%s1 + $0x78] sm:$0xff]
      %v217 = vld [vmem:[%s1 + $0x80] sm:$0xff]
      %v218 = vld [vmem:[%s1 + $0x88] sm:$0xff]
      %v219 = vld [vmem:[%s1 + $0x90] sm:$0xff]
      %v220 = vld [vmem:[%s1 + $0x98] sm:$0xff]
      %v221 = vld [vmem:[%s1 + $0xa0] sm:$0xff]
      %v222 = vld [vmem:[%s1 + $0xa8] sm:$0xff]
      %v223 = vld [vmem:[%s1 + $0xb0] sm:$0xff]
      %v224 = vld [vmem:[%s1 + $0xb8] sm:$0xff]
      %v225 = vld [vmem:[%s1 + $0xc0] sm:$0xff]
      %v226 = vld [vmem:[%s1 + $0xc8] sm:$0xff]
      %v227 = vld [vmem:[%s1 + $0xd0] sm:$0xff]
      %v228 = vld [vmem:[%s1 + $0xd8] sm:$0xff]
      %v229 = vld [vmem:[%s1 + $0xe0] sm:$0xff]
      %v230 = vld [vmem:[%s1 + $0xe8] sm:$0xff]
      %v231 = vld [vmem:[%s1 + $0xf0] sm:$0xff]
      %v232 = vld [vmem:[%s1 + $0xf8] sm:$0xff]
      %v233 = vld [vmem:[%s1 + $0x100] sm:$0xff]
      %v234 = vld [vmem:[%s1 + $0x108] sm:$0xff]
      %v235 = vld [vmem:[%s1 + $0x110] sm:$0xff]
      %v236 = vld [vmem:[%s1 + $0x118] sm:$0xff]
      %v237 = vld [vmem:[%s1 + $0x120] sm:$0xff]
      %v238 = vld [vmem:[%s1 + $0x128] sm:$0xff]
      %v239 = vld [vmem:[%s1 + $0x130] sm:$0xff]
      %v240 = vld [vmem:[%s1 + $0x138] sm:$0xff]
      %v241 = vld [vmem:[%s1 + $0x140] sm:$0xff]
      %v242 = vld [vmem:[%s1 + $0x148] sm:$0xff]
      %v243 = vld [vmem:[%s1 + $0x150] sm:$0xff]
      %v244 = vld [vmem:[%s1 + $0x158] sm:$0xff]
      %v245 = vld [vmem:[%s1 + $0x160] sm:$0xff]
      %v246 = vld [vmem:[%s1 + $0x168] sm:$0xff]
      %v247 = vld [vmem:[%s1 + $0x170] sm:$0xff]
      %v248 = vld [vmem:[%s1 + $0x178] sm:$0xff]
      %v249 = vld [vmem:[%s1 + $0x180] sm:$0xff]
      %v250 = vld [vmem:[%s1 + $0x188] sm:$0xff]
      %v251 = vld [vmem:[%s1 + $0x190] sm:$0xff]
      %v252 = vld [vmem:[%s1 + $0x198] sm:$0xff]
      %v253 = vld [vmem:[%s1 + $0x1a0] sm:$0xff]
      %v254 = vld [vmem:[%s1 + $0x1a8] sm:$0xff]
      %v255 = vld [vmem:[%s1 + $0x1b0] sm:$0xff]
      %v256 = vld [vmem:[%s1 + $0x1b8] sm:$0xff]
      %v257 = vld [vmem:[%s1 + $0x1c0] sm:$0xff]
      %v258 = vld [vmem:[%s1 + $0x1c8] sm:$0xff]
      %v259 = vld [vmem:[%s1 + $0x1d0] sm:$0xff]
      %v260 = vld [vmem:[%s1 + $0x1d8] sm:$0xff]
      %v261 = vld [vmem:[%s1 + $0x1e0] sm:$0xff]
      %v262 = vld [vmem:[%s1 + $0x1e8] sm:$0xff]
      %v263 = vld [vmem:[%s1 + $0x1f0] sm:$0xff]
      %v264 = vld [vmem:[%s1 + $0x1f8] sm:$0xff]
      %v265 = vld [vmem:[%s1 + $0x200] sm:$0xff]
      %v266 = vld [vmem:[%s1 + $0x208] sm:$0xff]
      %v267 = vld [vmem:[%s1 + $0x210] sm:$0xff]
      %v268 = vld [vmem:[%s1 + $0x218] sm:$0xff]
      %v269 = vld [vmem:[%s1 + $0x220] sm:$0xff]
      %v270 = vld [vmem:[%s1 + $0x228] sm:$0xff]
      %v271 = vld [vmem:[%s1 + $0x230] sm:$0xff]
      %v272 = vld [vmem:[%s1 + $0x238] sm:$0xff]
      %v273 = vld [vmem:[%s1 + $0x240] sm:$0xff]
      %v274 = vld [vmem:[%s1 + $0x248] sm:$0xff]
      %v275 = vld [vmem:[%s1 + $0x250] sm:$0xff]
      %v276 = vld [vmem:[%s1 + $0x258] sm:$0xff]
      %v277 = vld [vmem:[%s1 + $0x260] sm:$0xff]
      %v278 = vld [vmem:[%s1 + $0x268] sm:$0xff]
      %v279 = vld [vmem:[%s1 + $0x270] sm:$0xff]
      %v280 = vld [vmem:[%s1 + $0x278] sm:$0xff]
      %v281 = vld [vmem:[%s1 + $0x280] sm:$0xff]
      %v282 = vld [vmem:[%s1 + $0x288] sm:$0xff]
      %v283 = vld [vmem:[%s1 + $0x290] sm:$0xff]
      %v284 = vld [vmem:[%s1 + $0x298] sm:$0xff]
      %v285 = vld [vmem:[%s1 + $0x2a0] sm:$0xff]
      %v286 = vld [vmem:[%s1 + $0x2a8] sm:$0xff]
      %v287 = vld [vmem:[%s1 + $0x2b0] sm:$0xff]
      %v288 = vld [vmem:[%s1 + $0x2b8] sm:$0xff]
      %v289 = vld [vmem:[%s1 + $0x2c0] sm:$0xff]
      %v290 = vld [vmem:[%s1 + $0x2c8] sm:$0xff]
      %v291 = vld [vmem:[%s1 + $0x2d0] sm:$0xff]
      %v292 = vld [vmem:[%s1 + $0x2d8] sm:$0xff]
      %v293 = vld [vmem:[%s1 + $0x2e0] sm:$0xff]
      %v294 = vld [vmem:[%s1 + $0x2e8] sm:$0xff]
      %v295 = vld [vmem:[%s1 + $0x2f0] sm:$0xff]
      %v296 = vld [vmem:[%s1 + $0x2f8] sm:$0xff]
      %297 = vmatprep.subr.mxu0 0.0
      %298 = vmatpush1.msra.mxu0 %v216
      %299 = vmatprep.subr.mxu0 0.0
      %300 = vmatpush1.msra.mxu0 %v215
      %301 = vmatprep.subr.mxu0 0.0
      %302 = vmatpush1.msra.mxu0 %v214
      %303 = vmatprep.subr.mxu0 0.0
      %304 = vmatpush1.msra.mxu0 %v213
      %305 = vmatprep.subr.mxu0 0.0
      %306 = vmatpush1.msra.mxu0 %v212
      %307 = vmatprep.subr.mxu0 0.0
      %308 = vmatpush1.msra.mxu0 %v211
      %309 = vmatprep.subr.mxu0 0.0
      %310 = vmatpush1.msra.mxu0 %v210
      %311 = vmatprep.subr.mxu0 0.0
      %312 = vmatpush1.msra.mxu0 %v209
      %313 = vmatprep.subr.mxu0 0.0
      %314 = vmatpush1.msra.mxu0 %v208
      %315 = vmatprep.subr.mxu0 0.0
      %316 = vmatpush1.msra.mxu0 %v207
      %317 = vmatprep.subr.mxu0 0.0
      %318 = vmatpush1.msra.mxu0 %v206
      %319 = vmatprep.subr.mxu0 0.0
      %320 = vmatpush1.msra.mxu0 %v205
      %321 = vmatprep.subr.mxu0 0.0
      %322 = vmatpush1.msra.mxu0 %v204
      %323 = vmatprep.subr.mxu0 0.0
      %324 = vmatpush1.msra.mxu0 %v203
      %325 = vmatprep.subr.mxu0 0.0
      %326 = vmatpush1.msra.mxu0 %v202
      %327 = vmatprep.subr.mxu0 0.0
      %328 = vmatpush1.msra.mxu0 %v201
      %329 = vmatprep.subr.mxu0 0.0
      %330 = vmatpush2.msra.mxu0 %v232
      %331 = vmatprep.subr.mxu0 0.0
      %332 = vmatpush2.msra.mxu0 %v231
      %333 = vmatprep.subr.mxu0 0.0
      %334 = vmatpush2.msra.mxu0 %v230
      %335 = vmatprep.subr.mxu0 0.0
      %336 = vmatpush2.msra.mxu0 %v229
      %337 = vmatprep.subr.mxu0 0.0
      %338 = vmatpush2.msra.mxu0 %v228
      %339 = vmatprep.subr.mxu0 0.0
      %340 = vmatpush2.msra.mxu0 %v227
      %341 = vmatprep.subr.mxu0 0.0
      %342 = vmatpush2.msra.mxu0 %v226
      %343 = vmatprep.subr.mxu0 0.0
      %344 = vmatpush2.msra.mxu0 %v225
      %345 = vmatprep.subr.mxu0 0.0
      %346 = vmatpush2.msra.mxu0 %v224
      %347 = vmatprep.subr.mxu0 0.0
      %348 = vmatpush2.msra.mxu0 %v223
      %349 = vmatprep.subr.mxu0 0.0
      %350 = vmatpush2.msra.mxu0 %v222
      %351 = vmatprep.subr.mxu0 0.0
      %352 = vmatpush2.msra.mxu0 %v221
      %353 = vmatprep.subr.mxu0 0.0
      %354 = vmatpush2.msra.mxu0 %v220
      %355 = vmatprep.subr.mxu0 0.0
      %356 = vmatpush2.msra.mxu0 %v219
      %357 = vmatprep.subr.mxu0 0.0
      %358 = vmatpush2.msra.mxu0 %v218
      %359 = vmatprep.subr.mxu0 0.0
      %360 = vmatpush2.msra.mxu0 %v217
      %361 = vmatprep.mubr.f32.mxu0 %v178
      %362 = vmatmul.mubr.f32.gmra.mxu0 %v177
      %v363 = vpop.f32.mrf.mxu0
      %v364 = vadd.f32 0.0, %v363
      %v365 = vpop.f32.mrf.mxu0
      %366 = vmatprep.mubr.f32.mxu0 %v184
      %367 = vmatmul.mubr.f32.gmra.mxu0 %v183
      %v368 = vpop.f32.mrf.mxu0
      %v369 = vadd.f32 0.0, %v368
      %v370 = vpop.f32.mrf.mxu0
      %371 = vmatprep.mubr.f32.mxu0 %v190
      %372 = vmatmul.mubr.f32.gmra.mxu0 %v189
      %v373 = vpop.f32.mrf.mxu0
      %v374 = vadd.f32 0.0, %v373
      %v375 = vpop.f32.mrf.mxu0
      %376 = vmatprep.mubr.f32.mxu0 %v196
      %377 = vmatmul.mubr.f32.gmra.mxu0 %v195
      %v378 = vpop.f32.mrf.mxu0
      %v379 = vadd.f32 0.0, %v378
      %v380 = vpop.f32.mrf.mxu0
      %381 = vdwg.mxu0
      %382 = vmatprep.subr.mxu0 0.0
      %383 = vmatpush1.msra.mxu0 %v248
      %384 = vmatprep.subr.mxu0 0.0
      %385 = vmatpush1.msra.mxu0 %v247
      %386 = vmatprep.subr.mxu0 0.0
      %387 = vmatpush1.msra.mxu0 %v246
      %388 = vmatprep.subr.mxu0 0.0
      %389 = vmatpush1.msra.mxu0 %v245
      %390 = vmatprep.subr.mxu0 0.0
      %391 = vmatpush1.msra.mxu0 %v244
      %392 = vmatprep.subr.mxu0 0.0
      %393 = vmatpush1.msra.mxu0 %v243
      %394 = vmatprep.subr.mxu0 0.0
      %395 = vmatpush1.msra.mxu0 %v242
      %396 = vmatprep.subr.mxu0 0.0
      %397 = vmatpush1.msra.mxu0 %v241
      %398 = vmatprep.subr.mxu0 0.0
      %399 = vmatpush1.msra.mxu0 %v240
      %400 = vmatprep.subr.mxu0 0.0
      %401 = vmatpush1.msra.mxu0 %v239
      %402 = vmatprep.subr.mxu0 0.0
      %403 = vmatpush1.msra.mxu0 %v238
      %404 = vmatprep.subr.mxu0 0.0
      %405 = vmatpush1.msra.mxu0 %v237
      %406 = vmatprep.subr.mxu0 0.0
      %407 = vmatpush1.msra.mxu0 %v236
      %408 = vmatprep.subr.mxu0 0.0
      %409 = vmatpush1.msra.mxu0 %v235
      %410 = vmatprep.subr.mxu0 0.0
      %411 = vmatpush1.msra.mxu0 %v234
      %412 = vmatprep.subr.mxu0 0.0
      %413 = vmatpush1.msra.mxu0 %v233
      %414 = vmatprep.subr.mxu0 0.0
      %415 = vmatpush2.msra.mxu0 %v264
      %416 = vmatprep.subr.mxu0 0.0
      %417 = vmatpush2.msra.mxu0 %v263
      %418 = vmatprep.subr.mxu0 0.0
      %419 = vmatpush2.msra.mxu0 %v262
      %420 = vmatprep.subr.mxu0 0.0
      %421 = vmatpush2.msra.mxu0 %v261
      %422 = vmatprep.subr.mxu0 0.0
      %423 = vmatpush2.msra.mxu0 %v260
      %424 = vmatprep.subr.mxu0 0.0
      %425 = vmatpush2.msra.mxu0 %v259
      %426 = vmatprep.subr.mxu0 0.0
      %427 = vmatpush2.msra.mxu0 %v258
      %428 = vmatprep.subr.mxu0 0.0
      %429 = vmatpush2.msra.mxu0 %v257
      %430 = vmatprep.subr.mxu0 0.0
      %431 = vmatpush2.msra.mxu0 %v256
      %432 = vmatprep.subr.mxu0 0.0
      %433 = vmatpush2.msra.mxu0 %v255
      %434 = vmatprep.subr.mxu0 0.0
      %435 = vmatpush2.msra.mxu0 %v254
      %436 = vmatprep.subr.mxu0 0.0
      %437 = vmatpush2.msra.mxu0 %v253
      %438 = vmatprep.subr.mxu0 0.0
      %439 = vmatpush2.msra.mxu0 %v252
      %440 = vmatprep.subr.mxu0 0.0
      %441 = vmatpush2.msra.mxu0 %v251
      %442 = vmatprep.subr.mxu0 0.0
      %443 = vmatpush2.msra.mxu0 %v250
      %444 = vmatprep.subr.mxu0 0.0
      %445 = vmatpush2.msra.mxu0 %v249
      %446 = vmatprep.mubr.f32.mxu0 %v180
      %447 = vmatmul.mubr.f32.gmra.mxu0 %v179
      %v448 = vpop.f32.mrf.mxu0
      %v449 = vadd.f32 %v364, %v448
      %v450 = vpop.f32.mrf.mxu0
      %451 = vmatprep.mubr.f32.mxu0 %v186
      %452 = vmatmul.mubr.f32.gmra.mxu0 %v185
      %v453 = vpop.f32.mrf.mxu0
      %v454 = vadd.f32 %v369, %v453
      %v455 = vpop.f32.mrf.mxu0
      %456 = vmatprep.mubr.f32.mxu0 %v192
      %457 = vmatmul.mubr.f32.gmra.mxu0 %v191
      %v458 = vpop.f32.mrf.mxu0
      %v459 = vadd.f32 %v374, %v458
      %v460 = vpop.f32.mrf.mxu0
      %461 = vmatprep.mubr.f32.mxu0 %v198
      %462 = vmatmul.mubr.f32.gmra.mxu0 %v197
      %v463 = vpop.f32.mrf.mxu0
      %v464 = vadd.f32 %v379, %v463
      %v465 = vpop.f32.mrf.mxu0
      %466 = vdwg.mxu0
      %467 = vmatprep.subr.mxu0 0.0
      %468 = vmatpush1.msra.mxu0 %v280
      %469 = vmatprep.subr.mxu0 0.0
      %470 = vmatpush1.msra.mxu0 %v279
      %471 = vmatprep.subr.mxu0 0.0
      %472 = vmatpush1.msra.mxu0 %v278
      %473 = vmatprep.subr.mxu0 0.0
      %474 = vmatpush1.msra.mxu0 %v277
      %475 = vmatprep.subr.mxu0 0.0
      %476 = vmatpush1.msra.mxu0 %v276
      %477 = vmatprep.subr.mxu0 0.0
      %478 = vmatpush1.msra.mxu0 %v275
      %479 = vmatprep.subr.mxu0 0.0
      %480 = vmatpush1.msra.mxu0 %v274
      %481 = vmatprep.subr.mxu0 0.0
      %482 = vmatpush1.msra.mxu0 %v273
      %483 = vmatprep.subr.mxu0 0.0
      %484 = vmatpush1.msra.mxu0 %v272
      %485 = vmatprep.subr.mxu0 0.0
      %486 = vmatpush1.msra.mxu0 %v271
      %487 = vmatprep.subr.mxu0 0.0
      %488 = vmatpush1.msra.mxu0 %v270
      %489 = vmatprep.subr.mxu0 0.0
      %490 = vmatpush1.msra.mxu0 %v269
      %491 = vmatprep.subr.mxu0 0.0
      %492 = vmatpush1.msra.mxu0 %v268
      %493 = vmatprep.subr.mxu0 0.0
      %494 = vmatpush1.msra.mxu0 %v267
      %495 = vmatprep.subr.mxu0 0.0
      %496 = vmatpush1.msra.mxu0 %v266
      %497 = vmatprep.subr.mxu0 0.0
      %498 = vmatpush1.msra.mxu0 %v265
      %499 = vmatprep.subr.mxu0 0.0
      %500 = vmatpush2.msra.mxu0 %v296
      %501 = vmatprep.subr.mxu0 0.0
      %502 = vmatpush2.msra.mxu0 %v295
      %503 = vmatprep.subr.mxu0 0.0
      %504 = vmatpush2.msra.mxu0 %v294
      %505 = vmatprep.subr.mxu0 0.0
      %506 = vmatpush2.msra.mxu0 %v293
      %507 = vmatprep.subr.mxu0 0.0
      %508 = vmatpush2.msra.mxu0 %v292
      %509 = vmatprep.subr.mxu0 0.0
      %510 = vmatpush2.msra.mxu0 %v291
      %511 = vmatprep.subr.mxu0 0.0
      %512 = vmatpush2.msra.mxu0 %v290
      %513 = vmatprep.subr.mxu0 0.0
      %514 = vmatpush2.msra.mxu0 %v289
      %515 = vmatprep.subr.mxu0 0.0
      %516 = vmatpush2.msra.mxu0 %v288
      %517 = vmatprep.subr.mxu0 0.0
      %518 = vmatpush2.msra.mxu0 %v287
      %519 = vmatprep.subr.mxu0 0.0
      %520 = vmatpush2.msra.mxu0 %v286
      %521 = vmatprep.subr.mxu0 0.0
      %522 = vmatpush2.msra.mxu0 %v285
      %523 = vmatprep.subr.mxu0 0.0
      %524 = vmatpush2.msra.mxu0 %v284
      %525 = vmatprep.subr.mxu0 0.0
      %526 = vmatpush2.msra.mxu0 %v283
      %527 = vmatprep.subr.mxu0 0.0
      %528 = vmatpush2.msra.mxu0 %v282
      %529 = vmatprep.subr.mxu0 0.0
      %530 = vmatpush2.msra.mxu0 %v281
      %531 = vmatprep.mubr.f32.mxu0 %v182
      %532 = vmatmul.mubr.f32.gmra.mxu0 %v181
      %v533 = vpop.f32.mrf.mxu0
      %v534 = vadd.f32 %v449, %v533
      %v535 = vpop.f32.mrf.mxu0
      %536 = vmatprep.mubr.f32.mxu0 %v188
      %537 = vmatmul.mubr.f32.gmra.mxu0 %v187
      %v538 = vpop.f32.mrf.mxu0
      %v539 = vadd.f32 %v454, %v538
      %v540 = vpop.f32.mrf.mxu0
      %541 = vmatprep.mubr.f32.mxu0 %v194
      %542 = vmatmul.mubr.f32.gmra.mxu0 %v193
      %v543 = vpop.f32.mrf.mxu0
      %v544 = vadd.f32 %v459, %v543
      %v545 = vpop.f32.mrf.mxu0
      %546 = vmatprep.mubr.f32.mxu0 %v200
      %547 = vmatmul.mubr.f32.gmra.mxu0 %v199
      %v548 = vpop.f32.mrf.mxu0
      %v549 = vadd.f32 %v464, %v548
      %v550 = vpop.f32.mrf.mxu0
      %551 = vdwg.mxu0
      %v552 = vld [vmem:[%s2] sm:$0x1]
      %v554 = vlaneseq
      %v555 = vshrl.u32 %v554, 7
      %v556 = vsub.s32 0, %v555
      %v557 = vrot.slane %v552, %v556
      %vm559 = vcmp.ge.f32.partialorder %v534, %v557
      %vm560 = vcmp.ge.f32.partialorder %v539, %v557
      %vm561 = vcmp.ge.f32.partialorder %v544, %v557
      %vm562 = vcmp.ge.f32.partialorder %v549, %v557
      %v563 = vsel %vm559, 1, 0
      %v564 = vsel %vm560, 1, 0
      %v565 = vsel %vm561, 1, 0
      %v566 = vsel %vm562, 1, 0
      %vm567 = vcmask 39936
      %v568 = vsel %vm567, %v563, 0
      %v569 = vand.u32 %v568, 65535
      %v570 = vshrl.u32 %v568, 16
      %v571 = vcvt.s32.f32 %v569
      %v572 = vcvt.s32.f32 %v570
      %573 = vadd.xlane.f32.xlu0 %v571
      %v574 = vpop.xlane.xlu0 %573
      %575 = vadd.xlane.f32.xlu0 %v572
      %v576 = vpop.xlane.xlu0 %575
      %v577 = vcvt.f32.s32 %v574
      %v578 = vcvt.f32.s32 %v576
      %v579 = vshll.u32 %v578, 16
      %v580 = vadd.s32 %v579, %v577
      %v581 = vsel %vm567, %v564, 0
      %v582 = vand.u32 %v581, 65535
      %v583 = vshrl.u32 %v581, 16
      %v584 = vcvt.s32.f32 %v582
      %v585 = vcvt.s32.f32 %v583
      %586 = vadd.xlane.f32.xlu0 %v584
      %v587 = vpop.xlane.xlu0 %586
      %588 = vadd.xlane.f32.xlu0 %v585
      %v589 = vpop.xlane.xlu0 %588
      %v590 = vcvt.f32.s32 %v587
      %v591 = vcvt.f32.s32 %v589
      %v592 = vshll.u32 %v591, 16
      %v593 = vadd.s32 %v592, %v590
      %v594 = vsel %vm567, %v565, 0
      %v595 = vand.u32 %v594, 65535
      %v596 = vshrl.u32 %v594, 16
      %v597 = vcvt.s32.f32 %v595
      %v598 = vcvt.s32.f32 %v596
      %599 = vadd.xlane.f32.xlu0 %v597
      %v600 = vpop.xlane.xlu0 %599
      %601 = vadd.xlane.f32.xlu0 %v598
      %v602 = vpop.xlane.xlu0 %601
      %v603 = vcvt.f32.s32 %v600
      %v604 = vcvt.f32.s32 %v602
      %v605 = vshll.u32 %v604, 16
      %v606 = vadd.s32 %v605, %v603
      %v607 = vsel %vm567, %v566, 0
      %v608 = vand.u32 %v607, 65535
      %v609 = vshrl.u32 %v607, 16
      %v610 = vcvt.s32.f32 %v608
      %v611 = vcvt.s32.f32 %v609
      %612 = vadd.xlane.f32.xlu0 %v610
      %v613 = vpop.xlane.xlu0 %612
      %614 = vadd.xlane.f32.xlu0 %v611
      %v615 = vpop.xlane.xlu0 %614
      %v616 = vcvt.f32.s32 %v613
      %v617 = vcvt.f32.s32 %v615
      %v618 = vshll.u32 %v617, 16
      %v619 = vadd.s32 %v618, %v616
      %vm620 = vcmp.gt.s32.totalorder %v580, 2
      %vm621 = vcmp.gt.s32.totalorder %v593, 2
      %vm622 = vcmp.gt.s32.totalorder %v606, 2
      %vm623 = vcmp.gt.s32.totalorder %v619, 2
      %v624 = vsel %vm620, 1, 0
      %v625 = vsel %vm621, 1, 0
      %v626 = vsel %vm622, 1, 0
      %v627 = vsel %vm623, 1, 0
      %vm628 = vcmask 7168
      %629 = vst.msk [vmem:[%s175] sm:$0xff] %vm628, %v624
      %630 = vst.msk [vmem:[%s175 + $0x8] sm:$0xff] %vm628, %v625
      %631 = vst.msk [vmem:[%s175 + $0x10] sm:$0xff] %vm628, %v626
      %632 = vst.msk [vmem:[%s175 + $0x18] sm:$0xff] %vm628, %v627
      %s633 = smul.u32 4, %s14
      %p634 = scmp.lt.s32.totalorder %s633, 7
      %s635 = scalar_select %p634, %s633, 7
      %s636 = smul.addr %s635, 8
      %s637 = scalar_lea.vmem %s3, %s636
      // Predicated region
      $region33: #{tpu_custom_call.1} parent=31 // pred_check
        %p638 = pneg %p100
      $region34: #{tpu_custom_call.1} parent=31 // pred_check_branch
        %640 = sbr.rel (%p638) target = $region36
      $region35: #{tpu_custom_call.1} parent=31 // pred_region
        %s641 = smul.u32 4, %s14
      $region36: #{tpu_custom_call.1} parent=31 // pred_fallthru
        _
    $region32: #{tpu_custom_call.1} parent=5 // pred_fallthru
      _
    %p642 = scmp.le.s32.totalorder 2, %s9
    // Predicated region
    $region37: #{tpu_custom_call.1} parent=5 // pred_check
      %p643 = pneg %p642
    $region38: #{tpu_custom_call.1} parent=5 // pred_check_branch
      %645 = sbr.rel (%p643) target = $region40
    $region39: #{tpu_custom_call.1} parent=5 // pred_region
      %s646 = ssub.s32 %s9, 2
      // Predicated region
      $region41: #{tpu_custom_call.1} parent=39 // pred_check
        %p647 = pneg %p106
      $region42: #{tpu_custom_call.1} parent=39 // pred_check_branch
        %649 = sbr.rel (%p647) target = $region44
      $region43: #{tpu_custom_call.1} parent=39 // pred_region
        %s650 = smul.u32 4, %s15
        %p651 = scmp.lt.s32.totalorder %s650, 7
        %s652 = scalar_select %p651, %s650, 7
        %s653 = smul.addr %s652, 8
        %s654 = scalar_lea.vmem %s3, %s653
      $region44: #{tpu_custom_call.1} parent=39 // pred_fallthru
        _
    $region40: #{tpu_custom_call.1} parent=5 // pred_fallthru
      _
  $region6: #{tpu_custom_call.1} parent=0 // loop_footer
    %s13 = sadd.s32 1, %s9
  $region7: #{tpu_custom_call.1} parent=0 // loop_footer_branch
    %8 = sbr.rel target = $region3
  $region8: #{tpu_custom_call.1} parent=0 // loop_exit
    _

</llo_original>
